<compile_context>
chip_gen: v5e
topology: v5e:2x2
jax: 0.10.0
libtpu: 0.0.40
codegen_flags: <defaults>
</compile_context>

<pallas_src>
import jax
import jax.numpy as jnp
from jax import lax
from jax.experimental import pallas as pl
from jax.experimental.pallas import tpu as pltpu


def _bmm_add_kernel(inp_ref, x1_ref, x2_ref, o_ref):
    # inp_ref: (1,)     SMEM scalar (whole array, no blocking)
    # x1_ref : (K, M)   VMEM, resident across the batch grid
    # x2_ref : (K, N)   VMEM, batch slice selected by the grid index
    # o_ref  : (M, N)   VMEM, batch slice selected by the grid index
    acc = lax.dot_general(
        x1_ref[...], x2_ref[...],
        dimension_numbers=(((0,), (0,)), ((), ())),   # torch.t fold: contract K
        preferred_element_type=jnp.float32,
    )                                                  # (M, N) in f32
    o_ref[...] = acc + inp_ref[0]


def model_forward(x1, x2, inp):
    """x1: (K, M) f32, x2: (B, K, N) f32, inp: scalar. Returns (B, M, N) f32."""
    K, M = x1.shape
    B, K2, N = x2.shape
    assert K == K2, "contraction dims must match"

    inp_arr = jnp.reshape(jnp.asarray(inp, dtype=jnp.float32), (1,))

    out = pl.pallas_call(
        _bmm_add_kernel,
        out_shape=jax.ShapeDtypeStruct((B, M, N), jnp.float32),
        grid=(B,),
        in_specs=[
            # scalar add term: whole (1,) array in SMEM for every grid step
            pl.BlockSpec(memory_space=pltpu.MemorySpace.SMEM),
            # x1 stays resident (same block for every batch step)
            pl.BlockSpec((K, M), lambda b: (0, 0)),
            # x2: one batch slice per grid step; batch dim squeezed out
            pl.BlockSpec((None, K, N), lambda b: (b, 0, 0)),
        ],
        # output: one batch slice per grid step, lane-dense (M, N) store
        out_specs=pl.BlockSpec((None, M, N), lambda b: (b, 0, 0)),
        compiler_params=pltpu.CompilerParams(
            dimension_semantics=("parallel",),       # shard batch over TCs (v7x)
            vmem_limit_bytes=32 * 1024 * 1024,       # explicit, fits all gens
        ),
        cost_estimate=pl.CostEstimate(
            flops=2 * B * M * N * K + B * M * N,
            transcendentals=0,
            bytes_accessed=4 * (K * M + B * K * N + B * M * N),
        ),
    )(inp_arr, x1.astype(jnp.float32), x2.astype(jnp.float32))

    return out


# TODO(synk): if scaled beyond toy shapes, tile as grid=(B, M//tm, N//tn, K//tk)
# with K innermost ("arbitrary"), an f32 VMEM accumulator initialized to `inp`
# at k==0 and stored at the last k, bf16 inputs on v6e/v7x, and per-generation
# tile sizing (halve per-input tile bytes for v7x's 64 MiB VMEM).


if __name__ == "__main__":
    # Small, consistent shapes implied by the forward pass; N=128 keeps every
    # block exactly (8, 128)-aligned.
    K, M, N, B = 8, 8, 128, 2
    inp = 1  # as in the reference script

    key = jax.random.PRNGKey(0)
    k1, k2 = jax.random.split(key)
    x1 = jax.random.normal(k1, (K, M), dtype=jnp.float32)
    x2 = jax.random.normal(k2, (B, K, N), dtype=jnp.float32)

    out = jax.jit(model_forward)(x1, x2, jnp.float32(inp))
    jax.block_until_ready(out)

    # Reference check (plain JAX): out[b] = x1.T @ x2[b] + inp
    ref = jnp.einsum("km,bkn->bmn", x1, x2) + jnp.float32(inp)
    assert out.shape == (B, M, N)
    assert jnp.allclose(out, ref, atol=1e-5, rtol=1e-5)

    print("KERNEL_OK")
</pallas_src>

<mosaic_0001>
module attributes {stable_mosaic.version = 11 : i64} {
  func.func @_bmm_add_kernel(%arg0: i32, %arg1: memref<1xf32, #tpu.memory_space<smem>>, %arg2: memref<8x8xf32, #tpu.memory_space<vmem>>, %arg3: memref<1x8x128xf32, #tpu.memory_space<vmem>>, %arg4: memref<1x8x128xf32, #tpu.memory_space<vmem>>) attributes {dimension_semantics = [#tpu.dimension_semantics<parallel>], iteration_bounds = array<i64: 2>, scalar_prefetch = 0 : i64, scratch_operands = 0 : i64, tpu.core_type = #tpu.core_type<tc>, window_params = [{transform_indices = @transform_0, window_bounds = array<i64: 1>}, {pipeline_mode = #tpu.pipeline_mode<synchronous>, transform_indices = @transform_1, window_bounds = array<i64: 8, 8>}, {transform_indices = @transform_2, window_bounds = array<i64: 1, 8, 128>}, {transform_indices = @transform_3, window_bounds = array<i64: 1, 8, 128>}]} {
    %c0 = arith.constant 0 : index
    %c0_0 = arith.constant 0 : index
    %0 = vector.load %arg2[%c0, %c0_0] : memref<8x8xf32, #tpu.memory_space<vmem>>, vector<8x8xf32>
    %c0_1 = arith.constant 0 : index
    %c0_2 = arith.constant 0 : index
    %c0_3 = arith.constant 0 : index
    %1 = vector.load %arg3[%c0_1, %c0_2, %c0_3] : memref<1x8x128xf32, #tpu.memory_space<vmem>>, vector<1x8x128xf32>
    %2 = vector.shape_cast %1 : vector<1x8x128xf32> to vector<8x128xf32>
    %cst = arith.constant dense<0.000000e+00> : vector<8x128xf32>
    %3 = tpu.matmul %0, %2, %cst {dimension_numbers = #tpu.dot_dimension_numbers<[0], [0], [1], [1], [0, 1, 1, 1], [], []>} : vector<8x8xf32>, vector<8x128xf32>, vector<8x128xf32> -> vector<8x128xf32>
    %c0_4 = arith.constant 0 : index
    %4 = memref.load %arg1[%c0_4] : memref<1xf32, #tpu.memory_space<smem>>
    %5 = vector.broadcast %4 : f32 to vector<8x128xf32>
    %6 = arith.addf %3, %5 : vector<8x128xf32>
    %c0_5 = arith.constant 0 : index
    %c0_6 = arith.constant 0 : index
    %c0_7 = arith.constant 0 : index
    %7 = vector.load %arg4[%c0_5, %c0_6, %c0_7] : memref<1x8x128xf32, #tpu.memory_space<vmem>>, vector<1x8x128xf32>
    %8 = vector.shape_cast %7 : vector<1x8x128xf32> to vector<8x128xf32>
    %9 = vector.shape_cast %6 : vector<8x128xf32> to vector<1x8x128xf32>
    tpu.vector_store %arg4[%c0_5, %c0_6, %c0_7], %9 {strides = array<i32>} : memref<1x8x128xf32, #tpu.memory_space<vmem>>, vector<1x8x128xf32>,
    return
  }
  func.func @transform_0(%arg0: i32) -> i32 {
    %c0_i32 = arith.constant 0 : i32
    %c0_i32_0 = arith.constant 0 : i32
    return %c0_i32 : i32
  }
  func.func @transform_1(%arg0: i32) -> (i32, i32) {
    %c0_i32 = arith.constant 0 : i32
    %c0_i32_0 = arith.constant 0 : i32
    %c0_i32_1 = arith.constant 0 : i32
    return %c0_i32, %c0_i32_0 : i32, i32
  }
  func.func @transform_2(%arg0: i32) -> (i32, i32, i32) {
    %c0_i32 = arith.constant 0 : i32
    %c0_i32_0 = arith.constant 0 : i32
    %c0_i32_1 = arith.constant 0 : i32
    return %arg0, %c0_i32, %c0_i32_0 : i32, i32, i32
  }
  func.func @transform_3(%arg0: i32) -> (i32, i32, i32) {
    %c0_i32 = arith.constant 0 : i32
    %c0_i32_0 = arith.constant 0 : i32
    %c0_i32_1 = arith.constant 0 : i32
    return %arg0, %c0_i32, %c0_i32_0 : i32, i32, i32
  }
}

</mosaic_0001>

<llo_original>
// kernel: model_forward.1
$region0: #{model_forward.1}
  #allocation0 [shape = 'u32[]', space=smem, size = 0x4, offset = 0x4, fixed_abs, tag = 'smem constant byte address 0x4 - core index']
  #allocation1 [shape = 'u32[72,128]{1,0:T(1,128)}', space=vmem, size = 0x9000, scoped, tag = 'internal scratch']
  #allocation2 [shape = 'f32[1]{0:T(128)S(6)}', space=smem, size = 0x200, scoped, tag = 'scoped memory for model_forward.1']
  %s0 = inlined_call_operand.<no memory space> [shape: f32[1], index: 0, kind: input, shape index: {}]
  %s1 = inlined_call_operand.hbm [shape: f32[8,8], index: 1, kind: input, shape index: {}]
  %s2 = inlined_call_operand.hbm [shape: f32[2,8,128], index: 2, kind: input, shape index: {}]
  %s3 = inlined_call_operand.hbm [shape: f32[2,8,128], index: 3, kind: output, shape index: {}]
  %s4 = sld [smem:[#allocation0]]
  $region53: #{model_forward.1} parent=0
    _
  %s6 = ssub.s32 1, %s4
  %s7 = scalar_select 0, %s6, %s4
  %8 = sst [smem:[#allocation2]] %s0
  $region1: #{model_forward.1} parent=0
    #allocation3 [shape = 'u8[4096]{0}', space=vmem, size = 0x1000, scoped, tag = 'input window, operand 1, single buffered']
    #allocation4 [shape = 's32[2]{0}', space=sflag, size = 0x8, scoped, tag = 'scoped memory for model_forward.1']
    #allocation5 [shape = 's32[2]{0}', space=sflag, size = 0x8, scoped, tag = 'scoped memory for model_forward.1']
    #allocation6 [shape = 'u8[8192]{0}', space=vmem, size = 0x2000, scoped, tag = 'input window, operand 2']
    #allocation7 [shape = 's32[2]{0}', space=sflag, size = 0x8, scoped, tag = 'scoped memory for model_forward.1']
    #allocation8 [shape = 'u8[8192]{0}', space=vmem, size = 0x2000, scoped, tag = 'output window, operand 0']
    %9 = vsyncpa [#allocation4], 0
    %10 = vsyncpa [#allocation7], 0
    %s11 = scalar_lea.sflag [#allocation7], 1
    %12 = vsyncpa %s11, 0
    %13 = vsyncpa [#allocation5], 0
    %s14 = scalar_lea.sflag [#allocation5], 1
    %15 = vsyncpa %s14, 0
    loop: start=0, step=1, limit=4
    $region2: #{model_forward.1} parent=1 // loop_pre_header
      _
    $region3: #{model_forward.1} parent=1 // loop_header
      %s17 = sphi 0, %s21
      %p18 = scmp.ge.s32.totalorder %s17, 4
      %s25 = sphi 0, %s25
      %s27 = sphi 0, %s25
      %s28 = sphi 0, %s27
      %s42 = sphi 0, %s28
      %s46 = sphi 0, %s46
      %s48 = sphi 0, %s46
      %s49 = sphi 0, %s48
      %s63 = sphi 0, %s49
      %s69 = sphi 0, %s71
      %s72 = sphi 0, %s69
      %s73 = sphi 0, %s72
      %s89 = sphi 0, %s73
      %s95 = sphi 0, %s97
      %s98 = sphi 0, %s95
      %s99 = sphi 0, %s98
      %s115 = sphi 0, %s99
    $region4: #{model_forward.1} parent=1 // loop_header_branch
      %20 = sbr.rel (%p18) target = $region8
    $region5: #{model_forward.1} parent=1 // loop_body
      %s22 = ssub.s32 %s17, 1
      %s23 = ssub.s32 %s17, 2
      %s24 = sadd.s32 %s17, 1
      %s26 = sadd.s32 %s25, 1
      %p29 = scmp.eq.s32.totalorder %s17, 1
      %p30 = scmp.ne.s32.totalorder %s25, %s27
      %p31 = scmp.eq.s32.totalorder %s17, 0
      %p32 = por %p30, %p31
      %p33 = scmp.ne.s32.totalorder %s25, %s27
      %p34 = scmp.eq.s32.totalorder %s22, 1
      %p35 = por %p33, %p34
      %p36 = scmp.ne.s32.totalorder %s27, %s28
      %p37 = scmp.eq.s32.totalorder %s22, 0
      %p38 = por %p36, %p37
      %p39 = scmp.ne.s32.totalorder %s27, %s28
      %p40 = scmp.eq.s32.totalorder %s23, 1
      %p41 = por %p39, %p40
      %p43 = scmp.ne.s32.totalorder %s28, %s42
      %p44 = scmp.eq.s32.totalorder %s23, 0
      %p45 = por %p43, %p44
      %s47 = sadd.s32 %s46, 1
      %p50 = scmp.eq.s32.totalorder %s17, 1
      %p51 = scmp.ne.s32.totalorder %s46, %s48
      %p52 = scmp.eq.s32.totalorder %s17, 0
      %p53 = por %p51, %p52
      %p54 = scmp.ne.s32.totalorder %s46, %s48
      %p55 = scmp.eq.s32.totalorder %s22, 1
      %p56 = por %p54, %p55
      %p57 = scmp.ne.s32.totalorder %s48, %s49
      %p58 = scmp.eq.s32.totalorder %s22, 0
      %p59 = por %p57, %p58
      %p60 = scmp.ne.s32.totalorder %s48, %s49
      %p61 = scmp.eq.s32.totalorder %s23, 1
      %p62 = por %p60, %p61
      %p64 = scmp.ne.s32.totalorder %s49, %s63
      %p65 = scmp.eq.s32.totalorder %s23, 0
      %p66 = por %p64, %p65
      %s67 = ssub.s32 %s17, %s24
      %p68 = scmp.eq.s32.totalorder %s67, 0
      %s70 = sadd.s32 %s69, 1
      %s71 = scalar_select %p68, %s69, %s70
      %p74 = pneg %p68
      %p75 = scmp.eq.s32.totalorder %s17, 1
      %p76 = por %p74, %p75
      %p77 = scmp.ne.s32.totalorder %s69, %s72
      %p78 = scmp.eq.s32.totalorder %s17, 0
      %p79 = por %p77, %p78
      %p80 = scmp.ne.s32.totalorder %s69, %s72
      %p81 = scmp.eq.s32.totalorder %s22, 1
      %p82 = por %p80, %p81
      %p83 = scmp.ne.s32.totalorder %s72, %s73
      %p84 = scmp.eq.s32.totalorder %s22, 0
      %p85 = por %p83, %p84
      %p86 = scmp.ne.s32.totalorder %s72, %s73
      %p87 = scmp.eq.s32.totalorder %s23, 1
      %p88 = por %p86, %p87
      %p90 = scmp.ne.s32.totalorder %s73, %s89
      %p91 = scmp.eq.s32.totalorder %s23, 0
      %p92 = por %p90, %p91
      %s93 = ssub.s32 %s17, %s24
      %p94 = scmp.eq.s32.totalorder %s93, 0
      %s96 = sadd.s32 %s95, 1
      %s97 = scalar_select %p94, %s95, %s96
      %p100 = pneg %p94
      %p101 = scmp.eq.s32.totalorder %s17, 1
      %p102 = por %p100, %p101
      %p103 = scmp.ne.s32.totalorder %s95, %s98
      %p104 = scmp.eq.s32.totalorder %s17, 0
      %p105 = por %p103, %p104
      %p106 = scmp.ne.s32.totalorder %s95, %s98
      %p107 = scmp.eq.s32.totalorder %s22, 1
      %p108 = por %p106, %p107
      %p109 = scmp.ne.s32.totalorder %s98, %s99
      %p110 = scmp.eq.s32.totalorder %s22, 0
      %p111 = por %p109, %p110
      %p112 = scmp.ne.s32.totalorder %s98, %s99
      %p113 = scmp.eq.s32.totalorder %s23, 1
      %p114 = por %p112, %p113
      %p116 = scmp.ne.s32.totalorder %s99, %s115
      %p117 = scmp.eq.s32.totalorder %s23, 0
      %p118 = por %p116, %p117
      %p119 = scmp.le.s32.totalorder 1, %s17
      %p120 = scmp.lt.s32.totalorder %s17, 3
      %p121 = pnand %p119, %p120
      %p122 = pneg %p121
      // Predicated region
      $region9: #{model_forward.1} parent=5 // pred_check
        _
      $region10: #{model_forward.1} parent=5 // pred_check_branch
        %124 = sbr.rel (%p121) target = $region12
      $region11: #{model_forward.1} parent=5 // pred_region
        %s125 = ssub.s32 %s17, 1
        // Predicated region
        $region13: #{model_forward.1} parent=11 // pred_check
          %p126 = pneg %p38
        $region14: #{model_forward.1} parent=11 // pred_check_branch
          %128 = sbr.rel (%p126) target = $region16
        $region15: #{model_forward.1} parent=11 // pred_region
          _
        $region16: #{model_forward.1} parent=11 // pred_fallthru
          _
        // Predicated region
        $region17: #{model_forward.1} parent=11 // pred_check
          %p129 = pneg %p59
        $region18: #{model_forward.1} parent=11 // pred_check_branch
          %131 = sbr.rel (%p129) target = $region20
        $region19: #{model_forward.1} parent=11 // pred_region
          %133 = vsyncadd [#allocation4], 0
          %s135 = sshll.u32 %s1, 4
          %s136 = int_to_ptr.hbm [resolvable:$true] %s135
          %s137 = sshll.u32 [#allocation3], 4
          %s138 = int_to_ptr.vmem [resolvable:$true] %s137
          %140 = dma.hbm_to_vmem [thread:$0]  %s136, 128, %s138, [#allocation4]
        $region20: #{model_forward.1} parent=11 // pred_fallthru
          _
      $region12: #{model_forward.1} parent=5 // pred_fallthru
        _
      %p141 = scmp.lt.s32.totalorder %s17, 2
      // Predicated region
      $region21: #{model_forward.1} parent=5 // pred_check
        %p142 = pneg %p141
      $region22: #{model_forward.1} parent=5 // pred_check_branch
        %144 = sbr.rel (%p142) target = $region24
      $region23: #{model_forward.1} parent=5 // pred_region
        // Predicated region
        $region25: #{model_forward.1} parent=23 // pred_check
          %p145 = pneg %p79
        $region26: #{model_forward.1} parent=23 // pred_check_branch
          %147 = sbr.rel (%p145) target = $region28
        $region27: #{model_forward.1} parent=23 // pred_region
          %s148 = sand.u32 %s69, 1
          %s149 = scalar_lea.sflag [#allocation7], %s148
          %s150 = sand.u32 %s69, 1
          %s151 = smul.addr %s150, 8
          %s152 = scalar_lea.vmem [#allocation6], %s151
          %154 = vsyncadd %s149, 0
          %s155 = smul.addr %s17, 8
          %s156 = scalar_lea.hbm %s2, %s155
          %s158 = sshll.u32 %s156, 4
          %s159 = int_to_ptr.hbm [resolvable:$true] %s158
          %s160 = sshll.u32 %s152, 4
          %s161 = int_to_ptr.vmem [resolvable:$true] %s160
          %163 = dma.hbm_to_vmem [thread:$0]  %s159, 128, %s161, %s149
        $region28: #{model_forward.1} parent=23 // pred_fallthru
          _
      $region24: #{model_forward.1} parent=5 // pred_fallthru
        _
      %p164 = scmp.le.s32.totalorder 1, %s17
      %p165 = scmp.lt.s32.totalorder %s17, 3
      %p166 = pnand %p164, %p165
      %p167 = pneg %p166
      // Predicated region
      $region29: #{model_forward.1} parent=5 // pred_check
        _
      $region30: #{model_forward.1} parent=5 // pred_check_branch
        %169 = sbr.rel (%p166) target = $region32
      $region31: #{model_forward.1} parent=5 // pred_region
        %s170 = ssub.s32 %s17, 1
        // Predicated region
        $region33: #{model_forward.1} parent=31 // pred_check
          %p171 = pneg %p59
        $region34: #{model_forward.1} parent=31 // pred_check_branch
          %173 = sbr.rel (%p171) target = $region36
        $region35: #{model_forward.1} parent=31 // pred_region
          %175 = dma.done [#allocation4], 128
        $region36: #{model_forward.1} parent=31 // pred_fallthru
          _
        %s176 = sand.u32 %s72, 1
        %s177 = scalar_lea.sflag [#allocation7], %s176
        %s178 = sand.u32 %s72, 1
        %s179 = smul.addr %s178, 8
        %s180 = scalar_lea.vmem [#allocation6], %s179
        // Predicated region
        $region37: #{model_forward.1} parent=31 // pred_check
          %p181 = pneg %p85
        $region38: #{model_forward.1} parent=31 // pred_check_branch
          %183 = sbr.rel (%p181) target = $region40
        $region39: #{model_forward.1} parent=31 // pred_region
          %185 = dma.done %s177, 128
        $region40: #{model_forward.1} parent=31 // pred_fallthru
          _
        %p186 = pneg %p38
        %p187 = pneg %p35
        %p188 = pneg %p59
        %p189 = pneg %p56
        %s190 = sand.u32 %s72, 1
        %s191 = scalar_lea.sflag [#allocation7], %s190
        %s192 = sand.u32 %s72, 1
        %s193 = smul.addr %s192, 8
        %s194 = scalar_lea.vmem [#allocation6], %s193
        %p195 = pneg %p85
        %p196 = pneg %p82
        %p197 = pneg %p111
        %p198 = pneg %p108
        %s199 = sand.u32 %s98, 1
        %s200 = scalar_lea.sflag [#allocation5], %s199
        %s201 = sand.u32 %s98, 1
        %s202 = smul.addr %s201, 8
        %s203 = scalar_lea.vmem [#allocation8], %s202
        %v204 = vld [vmem:[#allocation3] sm:$0xff]
        %v205 = vld [vmem:[%s180] sm:$0xff]
        %s206 = sld [smem:[#allocation2]]
        %v207 = vstv %s206
        %208 = vxpose.xlu0.b32.start [1/16] %v204, 128
        %209 = vxpose.xlu0.b32.cont [2/16] 0.0, 128
        %210 = vxpose.xlu0.b32.cont [3/16] 0.0, 128
        %211 = vxpose.xlu0.b32.cont [4/16] 0.0, 128
        %212 = vxpose.xlu0.b32.cont [5/16] 0.0, 128
        %213 = vxpose.xlu0.b32.cont [6/16] 0.0, 128
        %214 = vxpose.xlu0.b32.cont [7/16] 0.0, 128
        %215 = vxpose.xlu0.b32.cont [8/16] 0.0, 128
        %216 = vxpose.xlu0.b32.cont [9/16] 0.0, 128
        %217 = vxpose.xlu0.b32.cont [10/16] 0.0, 128
        %218 = vxpose.xlu0.b32.cont [11/16] 0.0, 128
        %219 = vxpose.xlu0.b32.cont [12/16] 0.0, 128
        %220 = vxpose.xlu0.b32.cont [13/16] 0.0, 128
        %221 = vxpose.xlu0.b32.cont [14/16] 0.0, 128
        %222 = vxpose.xlu0.b32.cont [15/16] 0.0, 128
        %223 = vxpose.xlu0.b32.end [16/16] 0.0, 128
        %v224 = vpop.trf.xlu0
        %v225 = vpop.trf.xlu0
        %v226 = vpop.trf.xlu0
        %v227 = vpop.trf.xlu0
        %v228 = vpop.trf.xlu0
        %v229 = vpop.trf.xlu0
        %v230 = vpop.trf.xlu0
        %v231 = vpop.trf.xlu0
        %v232 = vpop.trf.xlu0
        %v233 = vpop.trf.xlu0
        %v234 = vpop.trf.xlu0
        %v235 = vpop.trf.xlu0
        %v236 = vpop.trf.xlu0
        %v237 = vpop.trf.xlu0
        %v238 = vpop.trf.xlu0
        %v239 = vpop.trf.xlu0
        %vm240 = vcmask 64512
        %v242 = vsel %vm240, %v224, 0
        %244 = vmatpush.msra.mxu0 0.0
        %245 = vmatpush.msra.mxu0 0.0
        %246 = vmatpush.msra.mxu0 0.0
        %247 = vmatpush.msra.mxu0 0.0
        %248 = vmatpush.msra.mxu0 0.0
        %249 = vmatpush.msra.mxu0 0.0
        %250 = vmatpush.msra.mxu0 0.0
        %251 = vmatpush.msra.mxu0 0.0
        %252 = vmatpush.msra.mxu0 0.0
        %253 = vmatpush.msra.mxu0 0.0
        %254 = vmatpush.msra.mxu0 0.0
        %255 = vmatpush.msra.mxu0 0.0
        %256 = vmatpush.msra.mxu0 0.0
        %257 = vmatpush.msra.mxu0 0.0
        %258 = vmatpush.msra.mxu0 0.0
        %259 = vmatpush.msra.mxu0 %v205
        %260 = vmatmul.f32.gmra.mxu0 %v242
        %v261 = vpop.f32.mrf.mxu0
        %v262 = vadd.f32 %v207, %v261
        %263 = vdwg.mxu0
        %264 = vst [vmem:[%s203] sm:$0xff] %v262
        %s265 = sand.u32 %s98, 1
        %s266 = scalar_lea.sflag [#allocation5], %s265
        %s267 = sand.u32 %s98, 1
        %s268 = smul.addr %s267, 8
        %s269 = scalar_lea.vmem [#allocation8], %s268
        // Predicated region
        $region41: #{model_forward.1} parent=31 // pred_check
          %p270 = pneg %p108
        $region42: #{model_forward.1} parent=31 // pred_check_branch
          %272 = sbr.rel (%p270) target = $region44
        $region43: #{model_forward.1} parent=31 // pred_region
          %274 = vsyncadd %s266, 0
          %s275 = smul.addr %s22, 8
          %s276 = scalar_lea.hbm %s3, %s275
          %s278 = sshll.u32 %s269, 4
          %s279 = int_to_ptr.vmem [resolvable:$true] %s278
          %s280 = sshll.u32 %s276, 4
          %s281 = int_to_ptr.hbm [resolvable:$true] %s280
          %283 = dma.vmem_to_hbm [thread:$0]  %s279, 128, %s281, %s266
        $region44: #{model_forward.1} parent=31 // pred_fallthru
          _
      $region32: #{model_forward.1} parent=5 // pred_fallthru
        _
      %p284 = scmp.le.s32.totalorder 2, %s17
      // Predicated region
      $region45: #{model_forward.1} parent=5 // pred_check
        %p285 = pneg %p284
      $region46: #{model_forward.1} parent=5 // pred_check_branch
        %287 = sbr.rel (%p285) target = $region48
      $region47: #{model_forward.1} parent=5 // pred_region
        %s288 = ssub.s32 %s17, 2
        // Predicated region
        $region49: #{model_forward.1} parent=47 // pred_check
          %p289 = pneg %p114
        $region50: #{model_forward.1} parent=47 // pred_check_branch
          %291 = sbr.rel (%p289) target = $region52
        $region51: #{model_forward.1} parent=47 // pred_region
          %s292 = sand.u32 %s99, 1
          %s293 = scalar_lea.sflag [#allocation5], %s292
          %s294 = sand.u32 %s99, 1
          %s295 = smul.addr %s294, 8
          %s296 = scalar_lea.vmem [#allocation8], %s295
          %298 = dma.done %s293, 128
        $region52: #{model_forward.1} parent=47 // pred_fallthru
          _
      $region48: #{model_forward.1} parent=5 // pred_fallthru
        _
    $region6: #{model_forward.1} parent=1 // loop_footer
      %s21 = sadd.s32 1, %s17
    $region7: #{model_forward.1} parent=1 // loop_footer_branch
      %16 = sbr.rel target = $region3
    $region8: #{model_forward.1} parent=1 // loop_exit
      _
    %299 = vsyncpa [#allocation4], 1
    %s300 = scalar_lea.sflag [#allocation4], 1
    %301 = vsyncpa %s300, 1
    %302 = vsyncpa [#allocation7], 1
    %s303 = scalar_lea.sflag [#allocation7], 1
    %304 = vsyncpa %s303, 1
    %305 = vsyncpa [#allocation5], 1
    %s306 = scalar_lea.sflag [#allocation5], 1
    %307 = vsyncpa %s306, 1

</llo_original>
